<compile_context>
chip_gen: v7x
topology: tpu7x:2x2x1
jax: 0.10.0
libtpu: 0.0.40
codegen_flags: <defaults>
</compile_context>

<pallas_src>
import jax
import jax.numpy as jnp
from jax.experimental import pallas as pl
from jax.experimental.pallas import tpu as pltpu


# ---------------------------------------------------------------------------
# Kernel
# ---------------------------------------------------------------------------
def _generator_kernel(theta_ref,            # SMEM (4,)  [edu, occupation, hours, income]
                      u1_ref, u2_ref, u3_ref,  # VMEM (bb, N) each
                      w1_ref, b1_ref,       # VMEM (3, N, H), (3, 1, H)
                      w2_ref, b2_ref,       # VMEM (3, H, 16), (1, 16)
                      out_ref):             # VMEM (6, bb)   feature-major (lane-dense)
    f32 = jnp.float32

    def layer1(u, i):
        h = jnp.dot(u, w1_ref[i], preferred_element_type=f32) + b1_ref[i]
        return jnp.maximum(h, 0.0)

    h_age = layer1(u1_ref[...], 0)          # (bb, H)
    h_sex = layer1(u2_ref[...], 1)
    h_hid = layer1(u3_ref[...], 2)

    # Layer 2: block-diagonal structure applied as three zero-padded (H, 16)
    # matmuls summed (no lane concat). Columns: 0=age, 1=sex(pre-sigmoid),
    # 2..14=hidden, 15=pad.
    z = (jnp.dot(h_age, w2_ref[0], preferred_element_type=f32)
         + jnp.dot(h_sex, w2_ref[1], preferred_element_type=f32)
         + jnp.dot(h_hid, w2_ref[2], preferred_element_type=f32)
         + b2_ref[...])                     # (bb, 16)

    # Single XLU transpose -> every epilogue op below is full-lane and the
    # output stores are lane-dense.
    zt = z.T                                # (16, bb)

    age = zt[0:1, :]                        # (1, bb)
    sex = jax.nn.sigmoid(zt[1:2, :])        # (1, bb)

    def h_row(i):
        return zt[2 + i:3 + i, :]           # hidden[:, i] as a full-lane row

    theta_edu = theta_ref[0]
    theta_occ = theta_ref[1]
    theta_hrs = theta_ref[2]
    theta_inc = theta_ref[3]

    # edu = (hidden[:, :2] * cat(age, sex)).sum(1) + theta_edu
    edu = h_row(0) * age + h_row(1) * sex + theta_edu
    # TODO(synk): `is_edu` override path (is_edu is not None) not implemented;
    # this kernel reproduces the default is_edu=None forward.

    # hours = (hidden[:, 2:5] * cat(age, sex, edu)).sum(1) + theta_hours
    hours = h_row(2) * age + h_row(3) * sex + h_row(4) * edu + theta_hrs

    # occup = sigmoid((hidden[:, 5:8] * cat(age, sex, edu)).sum(1) + theta_occupation)
    occup = jax.nn.sigmoid(h_row(5) * age + h_row(6) * sex + h_row(7) * edu + theta_occ)

    # income = sigmoid((hidden[:, 8:13] * cat(age, sex, edu, hours, occup)).sum(1)
    #                  + theta_income)
    income = jax.nn.sigmoid(h_row(8) * age + h_row(9) * sex + h_row(10) * edu
                            + h_row(11) * hours + h_row(12) * occup + theta_inc)

    # Sublane concat of six full-lane rows (cheap) -> (6, bb) lane-dense store.
    out_ref[...] = jnp.concatenate([age, sex, edu, hours, occup, income], axis=0)


# ---------------------------------------------------------------------------
# Host-side parameter packing (stacked per-feature weights, padded layer-2)
# ---------------------------------------------------------------------------
def pack_params(p, noise_size, hidden_size):
    N, H = noise_size, hidden_size
    f32 = jnp.float32

    w1s = jnp.stack([p["wa1"], p["ws1"], p["wh1"]]).astype(f32)   # (3, N, H)
    b1s = jnp.stack([p["ba1"], p["bs1"], p["bh1"]]).astype(f32)   # (3, 1, H)

    # Layer-2 weights padded to a shared (H, 16) column space:
    #   col 0 = age, col 1 = sex(pre-sigmoid), cols 2..14 = hidden, col 15 = pad.
    wa2p = jnp.zeros((H, 16), f32).at[:, 0:1].set(p["wa2"])
    ws2p = jnp.zeros((H, 16), f32).at[:, 1:2].set(p["ws2"])
    wh2p = jnp.zeros((H, 16), f32).at[:, 2:15].set(p["wh2"])
    w2s = jnp.stack([wa2p, ws2p, wh2p])                           # (3, H, 16)

    b2 = jnp.zeros((1, 16), f32)
    b2 = b2.at[:, 0:1].set(p["ba2"]).at[:, 1:2].set(p["bs2"]).at[:, 2:15].set(p["bh2"])

    theta = p["theta"].reshape(-1).astype(f32)                    # (4,) [edu,occ,hours,income]
    return w1s, b1s, w2s, b2, theta


# ---------------------------------------------------------------------------
# Wrapper
# ---------------------------------------------------------------------------
def _choose_batch_tile(B):
    if B <= 1024:
        return B                                      # single step, whole batch
    target = pl.cdiv(B, 4)                            # aim for >= 4 grid steps
    bb = ((target + 127) // 128) * 128                # lane-aligned output tiles
    return max(128, min(4096, bb))


def generator_forward(u1, u2, u3, packed):
    w1s, b1s, w2s, b2, theta = packed
    B, N = u1.shape
    H = w1s.shape[2]

    bb = _choose_batch_tile(B)
    grid = (pl.cdiv(B, bb),)

    vmem = pltpu.MemorySpace.VMEM
    smem = pltpu.MemorySpace.SMEM
    f32 = jnp.float32

    out_t = pl.pallas_call(
        _generator_kernel,
        out_shape=jax.ShapeDtypeStruct((6, B), f32),
        grid=grid,
        in_specs=[
            pl.BlockSpec(memory_space=smem),                                   # theta
            pl.BlockSpec((bb, N), lambda i: (i, 0), memory_space=vmem),        # u1
            pl.BlockSpec((bb, N), lambda i: (i, 0), memory_space=vmem),        # u2
            pl.BlockSpec((bb, N), lambda i: (i, 0), memory_space=vmem),        # u3
            pl.BlockSpec((3, N, H), lambda i: (0, 0, 0), memory_space=vmem),   # W1 stack
            pl.BlockSpec((3, 1, H), lambda i: (0, 0, 0), memory_space=vmem),   # b1 stack
            pl.BlockSpec((3, H, 16), lambda i: (0, 0, 0), memory_space=vmem),  # W2 stack (padded)
            pl.BlockSpec((1, 16), lambda i: (0, 0), memory_space=vmem),        # b2
        ],
        out_specs=pl.BlockSpec((6, bb), lambda i: (0, i), memory_space=vmem),
        compiler_params=pltpu.CompilerParams(
            dimension_semantics=("parallel",)),
    )(theta,
      u1.astype(f32), u2.astype(f32), u3.astype(f32),
      w1s, b1s, w2s, b2)

    # Kernel emits a lane-dense (6, B); transpose the tiny result back to the
    # PyTorch (B, 6) layout. Callers that can consume feature-major output can
    # skip this.
    return out_t.T


# ---------------------------------------------------------------------------
# Parameter init (PyTorch-like uniform init) and pure-JAX reference
# ---------------------------------------------------------------------------
def init_params(key, noise_size, hidden_size):
    ks = jax.random.split(key, 16)

    def lin(kw, kb, fan_in, fan_out):
        bound = 1.0 / (fan_in ** 0.5)
        w = jax.random.uniform(kw, (fan_in, fan_out), jnp.float32, -bound, bound)
        b = jax.random.uniform(kb, (1, fan_out), jnp.float32, -bound, bound)
        return w, b

    wa1, ba1 = lin(ks[0], ks[1], noise_size, hidden_size)
    wa2, ba2 = lin(ks[2], ks[3], hidden_size, 1)
    ws1, bs1 = lin(ks[4], ks[5], noise_size, hidden_size)
    ws2, bs2 = lin(ks[6], ks[7], hidden_size, 1)
    wh1, bh1 = lin(ks[8], ks[9], noise_size, hidden_size)
    wh2, bh2 = lin(ks[10], ks[11], hidden_size, 13)
    # theta order: [edu, occupation, hours, income]
    theta = 0.02 * jax.random.normal(ks[12], (1, 4), jnp.float32)
    return dict(wa1=wa1, ba1=ba1, wa2=wa2, ba2=ba2,
                ws1=ws1, bs1=bs1, ws2=ws2, bs2=bs2,
                wh1=wh1, bh1=bh1, wh2=wh2, bh2=bh2, theta=theta)


def _reference_forward(u1, u2, u3, p):
    """Pure-JAX reference replicating the PyTorch forward (is_edu=None)."""
    relu = lambda x: jnp.maximum(x, 0.0)
    sig = jax.nn.sigmoid
    age = relu(u1 @ p["wa1"] + p["ba1"]) @ p["wa2"] + p["ba2"]
    sex = sig(relu(u2 @ p["ws1"] + p["bs1"]) @ p["ws2"] + p["bs2"])
    hidden = relu(u3 @ p["wh1"] + p["bh1"]) @ p["wh2"] + p["bh2"]
    t = p["theta"][0]
    edu = (hidden[:, :2] * jnp.concatenate([age, sex], 1)).sum(1, keepdims=True) + t[0]
    hours = (hidden[:, 2:5] * jnp.concatenate([age, sex, edu], 1)).sum(1, keepdims=True) + t[2]
    occup = sig((hidden[:, 5:8] * jnp.concatenate([age, sex, edu], 1)).sum(1, keepdims=True) + t[1])
    income = sig((hidden[:, 8:13] * jnp.concatenate([age, sex, edu, hours, occup], 1)).sum(1, keepdims=True) + t[3])
    return jnp.concatenate([age, sex, edu, hours, occup, income], 1)


if __name__ == "__main__":
    noise_size, hidden_size = 32, 32

    key = jax.random.PRNGKey(0)
    k_p, k1, k2, k3, k4, k5, k6 = jax.random.split(key, 7)
    params = init_params(k_p, noise_size, hidden_size)
    packed = pack_params(params, noise_size, hidden_size)

    # --- small deterministic check (single grid step) -----------------------
    batch = 8
    u1 = jax.random.normal(k1, (batch, noise_size), jnp.float32)
    u2 = jax.random.normal(k2, (batch, noise_size), jnp.float32)
    u3 = jax.random.normal(k3, (batch, noise_size), jnp.float32)
    out = jax.block_until_ready(generator_forward(u1, u2, u3, packed))
    ref = _reference_forward(u1, u2, u3, params)
    assert out.shape == (batch, 6)
    assert jnp.allclose(out, ref, atol=1e-5, rtol=1e-5), "mismatch vs reference (small)"

    # --- larger batch exercising the multi-step pipelined grid (partial tail) -
    batch2 = 2500
    v1 = jax.random.normal(k4, (batch2, noise_size), jnp.float32)
    v2 = jax.random.normal(k5, (batch2, noise_size), jnp.float32)
    v3 = jax.random.normal(k6, (batch2, noise_size), jnp.float32)
    out2 = jax.block_until_ready(generator_forward(v1, v2, v3, packed))
    ref2 = _reference_forward(v1, v2, v3, params)
    assert out2.shape == (batch2, 6)
    assert jnp.allclose(out2, ref2, atol=1e-4, rtol=1e-4), "mismatch vs reference (large)"

    print("KERNEL_OK")
</pallas_src>

<mosaic_0001>
module attributes {stable_mosaic.version = 11 : i64} {
  func.func @_generator_kernel(%arg0: i32, %arg1: memref<4xf32, #tpu.memory_space<smem>>, %arg2: memref<8x32xf32, #tpu.memory_space<vmem>>, %arg3: memref<8x32xf32, #tpu.memory_space<vmem>>, %arg4: memref<8x32xf32, #tpu.memory_space<vmem>>, %arg5: memref<3x32x32xf32, #tpu.memory_space<vmem>>, %arg6: memref<3x1x32xf32, #tpu.memory_space<vmem>>, %arg7: memref<3x32x16xf32, #tpu.memory_space<vmem>>, %arg8: memref<1x16xf32, #tpu.memory_space<vmem>>, %arg9: memref<6x8xf32, #tpu.memory_space<vmem>>) attributes {dimension_semantics = [#tpu.dimension_semantics<parallel>], iteration_bounds = array<i64: 1>, scalar_prefetch = 0 : i64, scratch_operands = 0 : i64, tpu.core_type = #tpu.core_type<tc>, window_params = [{transform_indices = @transform_0, window_bounds = array<i64: 4>}, {transform_indices = @transform_1, window_bounds = array<i64: 8, 32>}, {transform_indices = @transform_2, window_bounds = array<i64: 8, 32>}, {transform_indices = @transform_3, window_bounds = array<i64: 8, 32>}, {pipeline_mode = #tpu.pipeline_mode<synchronous>, transform_indices = @transform_4, window_bounds = array<i64: 3, 32, 32>}, {pipeline_mode = #tpu.pipeline_mode<synchronous>, transform_indices = @transform_5, window_bounds = array<i64: 3, 1, 32>}, {pipeline_mode = #tpu.pipeline_mode<synchronous>, transform_indices = @transform_6, window_bounds = array<i64: 3, 32, 16>}, {pipeline_mode = #tpu.pipeline_mode<synchronous>, transform_indices = @transform_7, window_bounds = array<i64: 1, 16>}, {transform_indices = @transform_8, window_bounds = array<i64: 6, 8>}]} {
    %c0 = arith.constant 0 : index
    %c0_0 = arith.constant 0 : index
    %0 = vector.load %arg2[%c0, %c0_0] : memref<8x32xf32, #tpu.memory_space<vmem>>, vector<8x32xf32>
    %c0_1 = arith.constant 0 : index
    %c0_2 = arith.constant 0 : index
    %c0_3 = arith.constant 0 : index
    %1 = vector.load %arg5[%c0_1, %c0_2, %c0_3] : memref<3x32x32xf32, #tpu.memory_space<vmem>>, vector<1x32x32xf32>
    %2 = vector.shape_cast %1 : vector<1x32x32xf32> to vector<32x32xf32>
    %cst = arith.constant dense<0.000000e+00> : vector<8x32xf32>
    %3 = tpu.matmul %0, %2, %cst {dimension_numbers = #tpu.dot_dimension_numbers<[1], [0], [0], [1], [0, 0, 1, 1], [], []>} : vector<8x32xf32>, vector<32x32xf32>, vector<8x32xf32> -> vector<8x32xf32>
    %c0_4 = arith.constant 0 : index
    %c0_5 = arith.constant 0 : index
    %c0_6 = arith.constant 0 : index
    %4 = vector.load %arg6[%c0_4, %c0_5, %c0_6] : memref<3x1x32xf32, #tpu.memory_space<vmem>>, vector<1x1x32xf32>
    %5 = vector.shape_cast %4 : vector<1x1x32xf32> to vector<1x32xf32>
    %6 = vector.broadcast %5 : vector<1x32xf32> to vector<8x32xf32>
    %7 = arith.addf %3, %6 : vector<8x32xf32>
    %cst_7 = arith.constant 0.000000e+00 : f32
    %8 = vector.broadcast %cst_7 : f32 to vector<8x32xf32>
    %9 = arith.maximumf %7, %8 : vector<8x32xf32>
    %c0_8 = arith.constant 0 : index
    %c0_9 = arith.constant 0 : index
    %10 = vector.load %arg3[%c0_8, %c0_9] : memref<8x32xf32, #tpu.memory_space<vmem>>, vector<8x32xf32>
    %c1 = arith.constant 1 : index
    %c0_10 = arith.constant 0 : index
    %c0_11 = arith.constant 0 : index
    %11 = vector.load %arg5[%c1, %c0_10, %c0_11] : memref<3x32x32xf32, #tpu.memory_space<vmem>>, vector<1x32x32xf32>
    %12 = vector.shape_cast %11 : vector<1x32x32xf32> to vector<32x32xf32>
    %cst_12 = arith.constant dense<0.000000e+00> : vector<8x32xf32>
    %13 = tpu.matmul %10, %12, %cst_12 {dimension_numbers = #tpu.dot_dimension_numbers<[1], [0], [0], [1], [0, 0, 1, 1], [], []>} : vector<8x32xf32>, vector<32x32xf32>, vector<8x32xf32> -> vector<8x32xf32>
    %c1_13 = arith.constant 1 : index
    %c0_14 = arith.constant 0 : index
    %c0_15 = arith.constant 0 : index
    %14 = vector.load %arg6[%c1_13, %c0_14, %c0_15] : memref<3x1x32xf32, #tpu.memory_space<vmem>>, vector<1x1x32xf32>
    %15 = vector.shape_cast %14 : vector<1x1x32xf32> to vector<1x32xf32>
    %16 = vector.broadcast %15 : vector<1x32xf32> to vector<8x32xf32>
    %17 = arith.addf %13, %16 : vector<8x32xf32>
    %cst_16 = arith.constant 0.000000e+00 : f32
    %18 = vector.broadcast %cst_16 : f32 to vector<8x32xf32>
    %19 = arith.maximumf %17, %18 : vector<8x32xf32>
    %c0_17 = arith.constant 0 : index
    %c0_18 = arith.constant 0 : index
    %20 = vector.load %arg4[%c0_17, %c0_18] : memref<8x32xf32, #tpu.memory_space<vmem>>, vector<8x32xf32>
    %c2 = arith.constant 2 : index
    %c0_19 = arith.constant 0 : index
    %c0_20 = arith.constant 0 : index
    %21 = vector.load %arg5[%c2, %c0_19, %c0_20] : memref<3x32x32xf32, #tpu.memory_space<vmem>>, vector<1x32x32xf32>
    %22 = vector.shape_cast %21 : vector<1x32x32xf32> to vector<32x32xf32>
    %cst_21 = arith.constant dense<0.000000e+00> : vector<8x32xf32>
    %23 = tpu.matmul %20, %22, %cst_21 {dimension_numbers = #tpu.dot_dimension_numbers<[1], [0], [0], [1], [0, 0, 1, 1], [], []>} : vector<8x32xf32>, vector<32x32xf32>, vector<8x32xf32> -> vector<8x32xf32>
    %c2_22 = arith.constant 2 : index
    %c0_23 = arith.constant 0 : index
    %c0_24 = arith.constant 0 : index
    %24 = vector.load %arg6[%c2_22, %c0_23, %c0_24] : memref<3x1x32xf32, #tpu.memory_space<vmem>>, vector<1x1x32xf32>
    %25 = vector.shape_cast %24 : vector<1x1x32xf32> to vector<1x32xf32>
    %26 = vector.broadcast %25 : vector<1x32xf32> to vector<8x32xf32>
    %27 = arith.addf %23, %26 : vector<8x32xf32>
    %cst_25 = arith.constant 0.000000e+00 : f32
    %28 = vector.broadcast %cst_25 : f32 to vector<8x32xf32>
    %29 = arith.maximumf %27, %28 : vector<8x32xf32>
    %c0_26 = arith.constant 0 : index
    %c0_27 = arith.constant 0 : index
    %c0_28 = arith.constant 0 : index
    %30 = vector.load %arg7[%c0_26, %c0_27, %c0_28] : memref<3x32x16xf32, #tpu.memory_space<vmem>>, vector<1x32x16xf32>
    %31 = vector.shape_cast %30 : vector<1x32x16xf32> to vector<32x16xf32>
    %cst_29 = arith.constant dense<0.000000e+00> : vector<8x16xf32>
    %32 = tpu.matmul %9, %31, %cst_29 {dimension_numbers = #tpu.dot_dimension_numbers<[1], [0], [0], [1], [0, 0, 1, 1], [], []>} : vector<8x32xf32>, vector<32x16xf32>, vector<8x16xf32> -> vector<8x16xf32>
    %c1_30 = arith.constant 1 : index
    %c0_31 = arith.constant 0 : index
    %c0_32 = arith.constant 0 : index
    %33 = vector.load %arg7[%c1_30, %c0_31, %c0_32] : memref<3x32x16xf32, #tpu.memory_space<vmem>>, vector<1x32x16xf32>
    %34 = vector.shape_cast %33 : vector<1x32x16xf32> to vector<32x16xf32>
    %cst_33 = arith.constant dense<0.000000e+00> : vector<8x16xf32>
    %35 = tpu.matmul %19, %34, %cst_33 {dimension_numbers = #tpu.dot_dimension_numbers<[1], [0], [0], [1], [0, 0, 1, 1], [], []>} : vector<8x32xf32>, vector<32x16xf32>, vector<8x16xf32> -> vector<8x16xf32>
    %36 = arith.addf %32, %35 : vector<8x16xf32>
    %c2_34 = arith.constant 2 : index
    %c0_35 = arith.constant 0 : index
    %c0_36 = arith.constant 0 : index
    %37 = vector.load %arg7[%c2_34, %c0_35, %c0_36] : memref<3x32x16xf32, #tpu.memory_space<vmem>>, vector<1x32x16xf32>
    %38 = vector.shape_cast %37 : vector<1x32x16xf32> to vector<32x16xf32>
    %cst_37 = arith.constant dense<0.000000e+00> : vector<8x16xf32>
    %39 = tpu.matmul %29, %38, %cst_37 {dimension_numbers = #tpu.dot_dimension_numbers<[1], [0], [0], [1], [0, 0, 1, 1], [], []>} : vector<8x32xf32>, vector<32x16xf32>, vector<8x16xf32> -> vector<8x16xf32>
    %40 = arith.addf %36, %39 : vector<8x16xf32>
    %c0_38 = arith.constant 0 : index
    %c0_39 = arith.constant 0 : index
    %41 = vector.load %arg8[%c0_38, %c0_39] : memref<1x16xf32, #tpu.memory_space<vmem>>, vector<1x16xf32>
    %42 = vector.broadcast %41 : vector<1x16xf32> to vector<8x16xf32>
    %43 = arith.addf %40, %42 : vector<8x16xf32>
    %44 = tpu.transpose %43, [1, 0] : vector<8x16xf32> -> vector<16x8xf32>
    %45 = vector.extract_strided_slice %44 {offsets = [0, 0], sizes = [1, 8], strides = [1, 1]} : vector<16x8xf32> to vector<1x8xf32>
    %46 = vector.extract_strided_slice %44 {offsets = [1, 0], sizes = [1, 8], strides = [1, 1]} : vector<16x8xf32> to vector<1x8xf32>
    %47 = arith.negf %46 : vector<1x8xf32>
    %48 = math.exp %47 : vector<1x8xf32>
    %cst_40 = arith.constant 1.000000e+00 : f32
    %49 = vector.broadcast %cst_40 : f32 to vector<1x8xf32>
    %50 = arith.addf %49, %48 : vector<1x8xf32>
    %51 = arith.divf %49, %50 : vector<1x8xf32>
    %c0_41 = arith.constant 0 : index
    %52 = memref.load %arg1[%c0_41] : memref<4xf32, #tpu.memory_space<smem>>
    %c1_42 = arith.constant 1 : index
    %53 = memref.load %arg1[%c1_42] : memref<4xf32, #tpu.memory_space<smem>>
    %c2_43 = arith.constant 2 : index
    %54 = memref.load %arg1[%c2_43] : memref<4xf32, #tpu.memory_space<smem>>
    %c3 = arith.constant 3 : index
    %55 = memref.load %arg1[%c3] : memref<4xf32, #tpu.memory_space<smem>>
    %56 = vector.extract_strided_slice %44 {offsets = [2, 0], sizes = [1, 8], strides = [1, 1]} : vector<16x8xf32> to vector<1x8xf32>
    %57 = arith.mulf %56, %45 : vector<1x8xf32>
    %58 = vector.extract_strided_slice %44 {offsets = [3, 0], sizes = [1, 8], strides = [1, 1]} : vector<16x8xf32> to vector<1x8xf32>
    %59 = arith.mulf %58, %51 : vector<1x8xf32>
    %60 = arith.addf %57, %59 : vector<1x8xf32>
    %61 = vector.broadcast %52 : f32 to vector<1x8xf32>
    %62 = arith.addf %60, %61 : vector<1x8xf32>
    %63 = vector.extract_strided_slice %44 {offsets = [4, 0], sizes = [1, 8], strides = [1, 1]} : vector<16x8xf32> to vector<1x8xf32>
    %64 = arith.mulf %63, %45 : vector<1x8xf32>
    %65 = vector.extract_strided_slice %44 {offsets = [5, 0], sizes = [1, 8], strides = [1, 1]} : vector<16x8xf32> to vector<1x8xf32>
    %66 = arith.mulf %65, %51 : vector<1x8xf32>
    %67 = arith.addf %64, %66 : vector<1x8xf32>
    %68 = vector.extract_strided_slice %44 {offsets = [6, 0], sizes = [1, 8], strides = [1, 1]} : vector<16x8xf32> to vector<1x8xf32>
    %69 = arith.mulf %68, %62 : vector<1x8xf32>
    %70 = arith.addf %67, %69 : vector<1x8xf32>
    %71 = vector.broadcast %54 : f32 to vector<1x8xf32>
    %72 = arith.addf %70, %71 : vector<1x8xf32>
    %73 = vector.extract_strided_slice %44 {offsets = [7, 0], sizes = [1, 8], strides = [1, 1]} : vector<16x8xf32> to vector<1x8xf32>
    %74 = arith.mulf %73, %45 : vector<1x8xf32>
    %75 = vector.extract_strided_slice %44 {offsets = [8, 0], sizes = [1, 8], strides = [1, 1]} : vector<16x8xf32> to vector<1x8xf32>
    %76 = arith.mulf %75, %51 : vector<1x8xf32>
    %77 = arith.addf %74, %76 : vector<1x8xf32>
    %78 = vector.extract_strided_slice %44 {offsets = [9, 0], sizes = [1, 8], strides = [1, 1]} : vector<16x8xf32> to vector<1x8xf32>
    %79 = arith.mulf %78, %62 : vector<1x8xf32>
    %80 = arith.addf %77, %79 : vector<1x8xf32>
    %81 = vector.broadcast %53 : f32 to vector<1x8xf32>
    %82 = arith.addf %80, %81 : vector<1x8xf32>
    %83 = arith.negf %82 : vector<1x8xf32>
    %84 = math.exp %83 : vector<1x8xf32>
    %cst_44 = arith.constant 1.000000e+00 : f32
    %85 = vector.broadcast %cst_44 : f32 to vector<1x8xf32>
    %86 = arith.addf %85, %84 : vector<1x8xf32>
    %87 = arith.divf %85, %86 : vector<1x8xf32>
    %88 = vector.extract_strided_slice %44 {offsets = [10, 0], sizes = [1, 8], strides = [1, 1]} : vector<16x8xf32> to vector<1x8xf32>
    %89 = arith.mulf %88, %45 : vector<1x8xf32>
    %90 = vector.extract_strided_slice %44 {offsets = [11, 0], sizes = [1, 8], strides = [1, 1]} : vector<16x8xf32> to vector<1x8xf32>
    %91 = arith.mulf %90, %51 : vector<1x8xf32>
    %92 = arith.addf %89, %91 : vector<1x8xf32>
    %93 = vector.extract_strided_slice %44 {offsets = [12, 0], sizes = [1, 8], strides = [1, 1]} : vector<16x8xf32> to vector<1x8xf32>
    %94 = arith.mulf %93, %62 : vector<1x8xf32>
    %95 = arith.addf %92, %94 : vector<1x8xf32>
    %96 = vector.extract_strided_slice %44 {offsets = [13, 0], sizes = [1, 8], strides = [1, 1]} : vector<16x8xf32> to vector<1x8xf32>
    %97 = arith.mulf %96, %72 : vector<1x8xf32>
    %98 = arith.addf %95, %97 : vector<1x8xf32>
    %99 = vector.extract_strided_slice %44 {offsets = [14, 0], sizes = [1, 8], strides = [1, 1]} : vector<16x8xf32> to vector<1x8xf32>
    %100 = arith.mulf %99, %87 : vector<1x8xf32>
    %101 = arith.addf %98, %100 : vector<1x8xf32>
    %102 = vector.broadcast %55 : f32 to vector<1x8xf32>
    %103 = arith.addf %101, %102 : vector<1x8xf32>
    %104 = arith.negf %103 : vector<1x8xf32>
    %105 = math.exp %104 : vector<1x8xf32>
    %cst_45 = arith.constant 1.000000e+00 : f32
    %106 = vector.broadcast %cst_45 : f32 to vector<1x8xf32>
    %107 = arith.addf %106, %105 : vector<1x8xf32>
    %108 = arith.divf %106, %107 : vector<1x8xf32>
    %109 = tpu.concatenate %45, %51, %62, %72, %87, %108 in 0 : vector<1x8xf32>, vector<1x8xf32>, vector<1x8xf32>, vector<1x8xf32>, vector<1x8xf32>, vector<1x8xf32> -> vector<6x8xf32>
    %c0_46 = arith.constant 0 : index
    %c0_47 = arith.constant 0 : index
    %110 = vector.load %arg9[%c0_46, %c0_47] : memref<6x8xf32, #tpu.memory_space<vmem>>, vector<6x8xf32>
    tpu.vector_store %arg9[%c0_46, %c0_47], %109 {strides = array<i32>} : memref<6x8xf32, #tpu.memory_space<vmem>>, vector<6x8xf32>,
    return
  }
  func.func @transform_0(%arg0: i32) -> i32 {
    %c0_i32 = arith.constant 0 : i32
    %c0_i32_0 = arith.constant 0 : i32
    return %c0_i32 : i32
  }
  func.func @transform_1(%arg0: i32) -> (i32, i32) {
    %c0_i32 = arith.constant 0 : i32
    %c0_i32_0 = arith.constant 0 : i32
    return %arg0, %c0_i32 : i32, i32
  }
  func.func @transform_2(%arg0: i32) -> (i32, i32) {
    %c0_i32 = arith.constant 0 : i32
    %c0_i32_0 = arith.constant 0 : i32
    return %arg0, %c0_i32 : i32, i32
  }
  func.func @transform_3(%arg0: i32) -> (i32, i32) {
    %c0_i32 = arith.constant 0 : i32
    %c0_i32_0 = arith.constant 0 : i32
    return %arg0, %c0_i32 : i32, i32
  }
  func.func @transform_4(%arg0: i32) -> (i32, i32, i32) {
    %c0_i32 = arith.constant 0 : i32
    %c0_i32_0 = arith.constant 0 : i32
    %c0_i32_1 = arith.constant 0 : i32
    %c0_i32_2 = arith.constant 0 : i32
    return %c0_i32, %c0_i32_0, %c0_i32_1 : i32, i32, i32
  }
  func.func @transform_5(%arg0: i32) -> (i32, i32, i32) {
    %c0_i32 = arith.constant 0 : i32
    %c0_i32_0 = arith.constant 0 : i32
    %c0_i32_1 = arith.constant 0 : i32
    %c0_i32_2 = arith.constant 0 : i32
    return %c0_i32, %c0_i32_0, %c0_i32_1 : i32, i32, i32
  }
  func.func @transform_6(%arg0: i32) -> (i32, i32, i32) {
    %c0_i32 = arith.constant 0 : i32
    %c0_i32_0 = arith.constant 0 : i32
    %c0_i32_1 = arith.constant 0 : i32
    %c0_i32_2 = arith.constant 0 : i32
    return %c0_i32, %c0_i32_0, %c0_i32_1 : i32, i32, i32
  }
  func.func @transform_7(%arg0: i32) -> (i32, i32) {
    %c0_i32 = arith.constant 0 : i32
    %c0_i32_0 = arith.constant 0 : i32
    %c0_i32_1 = arith.constant 0 : i32
    return %c0_i32, %c0_i32_0 : i32, i32
  }
  func.func @transform_8(%arg0: i32) -> (i32, i32) {
    %c0_i32 = arith.constant 0 : i32
    %c0_i32_0 = arith.constant 0 : i32
    return %c0_i32, %arg0 : i32, i32
  }
}

</mosaic_0001>

<llo_original>
// kernel: tpu_custom_call.1
$region0: #{tpu_custom_call.1}
  #allocation0 [shape = 'u32[]', space=smem, size = 0x4, offset = 0x4, fixed_abs, tag = 'smem constant byte address 0x4 - core index']
  #allocation1 [shape = 'u32[144,128]{1,0:T(1,128)}', space=vmem, size = 0x12000, scoped, tag = 'internal scratch']
  %s0 = inlined_call_operand.vmem [shape: f32[4], index: 0, kind: input, shape index: {}]
  %s1 = inlined_call_operand.vmem [shape: f32[8,32], index: 1, kind: input, shape index: {}]
  %s2 = inlined_call_operand.vmem [shape: f32[8,32], index: 2, kind: input, shape index: {}]
  %s3 = inlined_call_operand.vmem [shape: f32[8,32], index: 3, kind: input, shape index: {}]
  %s4 = inlined_call_operand.vmem [shape: f32[3,32,32], index: 4, kind: input, shape index: {}]
  %s5 = inlined_call_operand.vmem [shape: f32[3,1,32], index: 5, kind: input, shape index: {}]
  %s6 = inlined_call_operand.vmem [shape: f32[3,32,16], index: 6, kind: input, shape index: {}]
  %s7 = inlined_call_operand.vmem [shape: f32[1,16], index: 7, kind: input, shape index: {}]
  %s8 = inlined_call_operand.hbm [shape: f32[6,8], index: 8, kind: output, shape index: {}]
  %s9 = sld [smem:[#allocation0]]
  $region46: #{tpu_custom_call.1} parent=0
    _
  %s11 = ssub.s32 1, %s9
  %s12 = scalar_select 0, %s11, %s9
  $region1: #{tpu_custom_call.1} parent=0
    #allocation2 [shape = 'u8[512]{0}', space=smem, size = 0x200, scoped, tag = 'input window, operand 0, single buffered']
    #allocation3 [shape = 's32[1]{0}', space=sflag, size = 0x4, scoped, tag = 'scoped memory for tpu_custom_call.1']
    #allocation4 [shape = 's32[1]{0}', space=sflag, size = 0x4, scoped, tag = 'scoped memory for tpu_custom_call.1']
    #allocation5 [shape = 'u8[4096]{0}', space=vmem, size = 0x1000, scoped, tag = 'output window, operand 0, single buffered']
    %13 = vsyncpa [#allocation4], 0
    %14 = vsyncpa [#allocation3], 0
    // Predicated region
    $region2: #{tpu_custom_call.1} parent=1 // pred_check
      _
    $region3: #{tpu_custom_call.1} parent=1 // pred_check_branch
      %16 = sbr.rel (0) target = $region5
    $region4: #{tpu_custom_call.1} parent=1 // pred_region
      %s18 = ssub.s32 16, 16
      %19 = vsyncadd [#allocation4], %s18
      %s21 = sshll.u32 %s0, 4
      %s22 = int_to_ptr.vmem [resolvable:$true] %s21
      %24 = dma.vmem_to_smem %s22, 16, [#allocation2], [#allocation4]
    $region5: #{tpu_custom_call.1} parent=1 // pred_fallthru
      _
    // Predicated region
    $region6: #{tpu_custom_call.1} parent=1 // pred_check
      _
    $region7: #{tpu_custom_call.1} parent=1 // pred_check_branch
      %26 = sbr.rel (0) target = $region9
    $region8: #{tpu_custom_call.1} parent=1 // pred_region
      _
    $region9: #{tpu_custom_call.1} parent=1 // pred_fallthru
      _
    // Predicated region
    $region10: #{tpu_custom_call.1} parent=1 // pred_check
      _
    $region11: #{tpu_custom_call.1} parent=1 // pred_check_branch
      %28 = sbr.rel (0) target = $region13
    $region12: #{tpu_custom_call.1} parent=1 // pred_region
      _
    $region13: #{tpu_custom_call.1} parent=1 // pred_fallthru
      _
    // Predicated region
    $region14: #{tpu_custom_call.1} parent=1 // pred_check
      _
    $region15: #{tpu_custom_call.1} parent=1 // pred_check_branch
      %30 = sbr.rel (0) target = $region17
    $region16: #{tpu_custom_call.1} parent=1 // pred_region
      _
    $region17: #{tpu_custom_call.1} parent=1 // pred_fallthru
      _
    // Predicated region
    $region18: #{tpu_custom_call.1} parent=1 // pred_check
      _
    $region19: #{tpu_custom_call.1} parent=1 // pred_check_branch
      %32 = sbr.rel (0) target = $region21
    $region20: #{tpu_custom_call.1} parent=1 // pred_region
      _
    $region21: #{tpu_custom_call.1} parent=1 // pred_fallthru
      _
    // Predicated region
    $region22: #{tpu_custom_call.1} parent=1 // pred_check
      _
    $region23: #{tpu_custom_call.1} parent=1 // pred_check_branch
      %34 = sbr.rel (0) target = $region25
    $region24: #{tpu_custom_call.1} parent=1 // pred_region
      _
    $region25: #{tpu_custom_call.1} parent=1 // pred_fallthru
      _
    // Predicated region
    $region26: #{tpu_custom_call.1} parent=1 // pred_check
      _
    $region27: #{tpu_custom_call.1} parent=1 // pred_check_branch
      %36 = sbr.rel (0) target = $region29
    $region28: #{tpu_custom_call.1} parent=1 // pred_region
      _
    $region29: #{tpu_custom_call.1} parent=1 // pred_fallthru
      _
    // Predicated region
    $region30: #{tpu_custom_call.1} parent=1 // pred_check
      _
    $region31: #{tpu_custom_call.1} parent=1 // pred_check_branch
      %38 = sbr.rel (0) target = $region33
    $region32: #{tpu_custom_call.1} parent=1 // pred_region
      _
    $region33: #{tpu_custom_call.1} parent=1 // pred_fallthru
      _
    // Predicated region
    $region34: #{tpu_custom_call.1} parent=1 // pred_check
      _
    $region35: #{tpu_custom_call.1} parent=1 // pred_check_branch
      %40 = sbr.rel (0) target = $region37
    $region36: #{tpu_custom_call.1} parent=1 // pred_region
      %41 = dma.done [#allocation4], 16
    $region37: #{tpu_custom_call.1} parent=1 // pred_fallthru
      _
    %42 = sfence
    %v43 = vld [vmem:[%s1] sm:$0xff]
    %v44 = vld [vmem:[%s4] sm:$0xff]
    %v45 = vld [vmem:[%s4 + $0x8] sm:$0xff]
    %v46 = vld [vmem:[%s4 + $0x10] sm:$0xff]
    %v47 = vld [vmem:[%s4 + $0x18] sm:$0xff]
    %v48 = vld [vmem:[%s5] sm:$0x1]
    %v50 = vlaneseq
    %v51 = vshrl.u32 %v50, 7
    %v52 = vsub.s32 0, %v51
    %v53 = vrot.slane %v48, %v52
    %vm55 = vcmask 261120
    %v57 = vsel %vm55, %v43, 0
    %59 = vmatprep.subr.mxu0 0.0
    %60 = vmatpush1.msra.mxu0 %v44
    %61 = vmatprep.subr.mxu0 0.0
    %62 = vmatpush1.msra.mxu0 %v45
    %63 = vmatprep.subr.mxu0 0.0
    %64 = vmatpush1.msra.mxu0 %v46
    %65 = vmatprep.subr.mxu0 0.0
    %66 = vmatpush1.msra.mxu0 %v47
    %67 = vmatprep.subr.mxu0 0.0
    %68 = vmatpush1.msra.mxu0 0.0
    %69 = vmatprep.subr.mxu0 0.0
    %70 = vmatpush1.msra.mxu0 0.0
    %71 = vmatprep.subr.mxu0 0.0
    %72 = vmatpush1.msra.mxu0 0.0
    %73 = vmatprep.subr.mxu0 0.0
    %74 = vmatpush1.msra.mxu0 0.0
    %75 = vmatprep.subr.mxu0 0.0
    %76 = vmatpush1.msra.mxu0 0.0
    %77 = vmatprep.subr.mxu0 0.0
    %78 = vmatpush1.msra.mxu0 0.0
    %79 = vmatprep.subr.mxu0 0.0
    %80 = vmatpush1.msra.mxu0 0.0
    %81 = vmatprep.subr.mxu0 0.0
    %82 = vmatpush1.msra.mxu0 0.0
    %83 = vmatprep.subr.mxu0 0.0
    %84 = vmatpush1.msra.mxu0 0.0
    %85 = vmatprep.subr.mxu0 0.0
    %86 = vmatpush1.msra.mxu0 0.0
    %87 = vmatprep.subr.mxu0 0.0
    %88 = vmatpush1.msra.mxu0 0.0
    %89 = vmatprep.subr.mxu0 0.0
    %90 = vmatpush1.msra.mxu0 0.0
    %91 = vmatprep.subr.mxu0 0.0
    %92 = vmatpush1.msra.mxu0 0.0
    %93 = vmatprep.subr.mxu0 0.0
    %94 = vmatpush1.msra.mxu0 0.0
    %95 = vmatprep.subr.mxu0 0.0
    %96 = vmatpush1.msra.mxu0 0.0
    %97 = vmatprep.subr.mxu0 0.0
    %98 = vmatpush1.msra.mxu0 0.0
    %99 = vmatprep.subr.mxu0 0.0
    %100 = vmatpush1.msra.mxu0 0.0
    %101 = vmatprep.subr.mxu0 0.0
    %102 = vmatpush1.msra.mxu0 0.0
    %103 = vmatprep.subr.mxu0 0.0
    %104 = vmatpush1.msra.mxu0 0.0
    %105 = vmatprep.subr.mxu0 0.0
    %106 = vmatpush1.msra.mxu0 0.0
    %107 = vmatprep.subr.mxu0 0.0
    %108 = vmatpush1.msra.mxu0 0.0
    %109 = vmatprep.subr.mxu0 0.0
    %110 = vmatpush1.msra.mxu0 0.0
    %111 = vmatprep.subr.mxu0 0.0
    %112 = vmatpush1.msra.mxu0 0.0
    %113 = vmatprep.subr.mxu0 0.0
    %114 = vmatpush1.msra.mxu0 0.0
    %115 = vmatprep.subr.mxu0 0.0
    %116 = vmatpush1.msra.mxu0 0.0
    %117 = vmatprep.subr.mxu0 0.0
    %118 = vmatpush1.msra.mxu0 0.0
    %119 = vmatprep.subr.mxu0 0.0
    %120 = vmatpush1.msra.mxu0 0.0
    %121 = vmatprep.subr.mxu0 0.0
    %122 = vmatpush1.msra.mxu0 0.0
    %123 = vmatprep.mubr.f32.mxu0 0.0
    %124 = vmatmul.mubr.f32.gmra.mrb[0].mxu0 %v57
    %v125 = vpop.f32.mrb[0].mxu0
    %v126 = vadd.f32 %v53, %v125
    %v127 = vpop.f32.mrb[0].mxu0
    %128 = vdwg.mxu0
    %v129 = vmax.f32 %v126, 0.0
    %v130 = vld [vmem:[%s2] sm:$0xff]
    %s131 = scalar_lea.vmem %s4, 32
    %v132 = vld [vmem:[%s131] sm:$0xff]
    %v133 = vld [vmem:[%s131 + $0x8] sm:$0xff]
    %v134 = vld [vmem:[%s131 + $0x10] sm:$0xff]
    %v135 = vld [vmem:[%s131 + $0x18] sm:$0xff]
    %s136 = scalar_lea.vmem %s5, 1
    %v137 = vld [vmem:[%s136] sm:$0x1]
    %v139 = vlaneseq
    %v140 = vshrl.u32 %v139, 7
    %v141 = vsub.s32 0, %v140
    %v142 = vrot.slane %v137, %v141
    %v145 = vsel %vm55, %v130, 0
    %147 = vmatprep.subr.mxu0 0.0
    %148 = vmatpush1.msra.mxu0 %v132
    %149 = vmatprep.subr.mxu0 0.0
    %150 = vmatpush1.msra.mxu0 %v133
    %151 = vmatprep.subr.mxu0 0.0
    %152 = vmatpush1.msra.mxu0 %v134
    %153 = vmatprep.subr.mxu0 0.0
    %154 = vmatpush1.msra.mxu0 %v135
    %155 = vmatprep.subr.mxu0 0.0
    %156 = vmatpush1.msra.mxu0 0.0
    %157 = vmatprep.subr.mxu0 0.0
    %158 = vmatpush1.msra.mxu0 0.0
    %159 = vmatprep.subr.mxu0 0.0
    %160 = vmatpush1.msra.mxu0 0.0
    %161 = vmatprep.subr.mxu0 0.0
    %162 = vmatpush1.msra.mxu0 0.0
    %163 = vmatprep.subr.mxu0 0.0
    %164 = vmatpush1.msra.mxu0 0.0
    %165 = vmatprep.subr.mxu0 0.0
    %166 = vmatpush1.msra.mxu0 0.0
    %167 = vmatprep.subr.mxu0 0.0
    %168 = vmatpush1.msra.mxu0 0.0
    %169 = vmatprep.subr.mxu0 0.0
    %170 = vmatpush1.msra.mxu0 0.0
    %171 = vmatprep.subr.mxu0 0.0
    %172 = vmatpush1.msra.mxu0 0.0
    %173 = vmatprep.subr.mxu0 0.0
    %174 = vmatpush1.msra.mxu0 0.0
    %175 = vmatprep.subr.mxu0 0.0
    %176 = vmatpush1.msra.mxu0 0.0
    %177 = vmatprep.subr.mxu0 0.0
    %178 = vmatpush1.msra.mxu0 0.0
    %179 = vmatprep.subr.mxu0 0.0
    %180 = vmatpush1.msra.mxu0 0.0
    %181 = vmatprep.subr.mxu0 0.0
    %182 = vmatpush1.msra.mxu0 0.0
    %183 = vmatprep.subr.mxu0 0.0
    %184 = vmatpush1.msra.mxu0 0.0
    %185 = vmatprep.subr.mxu0 0.0
    %186 = vmatpush1.msra.mxu0 0.0
    %187 = vmatprep.subr.mxu0 0.0
    %188 = vmatpush1.msra.mxu0 0.0
    %189 = vmatprep.subr.mxu0 0.0
    %190 = vmatpush1.msra.mxu0 0.0
    %191 = vmatprep.subr.mxu0 0.0
    %192 = vmatpush1.msra.mxu0 0.0
    %193 = vmatprep.subr.mxu0 0.0
    %194 = vmatpush1.msra.mxu0 0.0
    %195 = vmatprep.subr.mxu0 0.0
    %196 = vmatpush1.msra.mxu0 0.0
    %197 = vmatprep.subr.mxu0 0.0
    %198 = vmatpush1.msra.mxu0 0.0
    %199 = vmatprep.subr.mxu0 0.0
    %200 = vmatpush1.msra.mxu0 0.0
    %201 = vmatprep.subr.mxu0 0.0
    %202 = vmatpush1.msra.mxu0 0.0
    %203 = vmatprep.subr.mxu0 0.0
    %204 = vmatpush1.msra.mxu0 0.0
    %205 = vmatprep.subr.mxu0 0.0
    %206 = vmatpush1.msra.mxu0 0.0
    %207 = vmatprep.subr.mxu0 0.0
    %208 = vmatpush1.msra.mxu0 0.0
    %209 = vmatprep.subr.mxu0 0.0
    %210 = vmatpush1.msra.mxu0 0.0
    %211 = vmatprep.mubr.f32.mxu0 0.0
    %212 = vmatmul.mubr.f32.gmra.mrb[0].mxu0 %v145
    %v213 = vpop.f32.mrb[0].mxu0
    %v214 = vadd.f32 %v142, %v213
    %v215 = vpop.f32.mrb[0].mxu0
    %216 = vdwg.mxu0
    %v217 = vmax.f32 %v214, 0.0
    %v218 = vld [vmem:[%s3] sm:$0xff]
    %s219 = scalar_lea.vmem %s4, 64
    %v220 = vld [vmem:[%s219] sm:$0xff]
    %v221 = vld [vmem:[%s219 + $0x8] sm:$0xff]
    %v222 = vld [vmem:[%s219 + $0x10] sm:$0xff]
    %v223 = vld [vmem:[%s219 + $0x18] sm:$0xff]
    %s224 = scalar_lea.vmem %s5, 2
    %v225 = vld [vmem:[%s224] sm:$0x1]
    %v227 = vlaneseq
    %v228 = vshrl.u32 %v227, 7
    %v229 = vsub.s32 0, %v228
    %v230 = vrot.slane %v225, %v229
    %v233 = vsel %vm55, %v218, 0
    %235 = vmatprep.subr.mxu0 0.0
    %236 = vmatpush1.msra.mxu0 %v220
    %237 = vmatprep.subr.mxu0 0.0
    %238 = vmatpush1.msra.mxu0 %v221
    %239 = vmatprep.subr.mxu0 0.0
    %240 = vmatpush1.msra.mxu0 %v222
    %241 = vmatprep.subr.mxu0 0.0
    %242 = vmatpush1.msra.mxu0 %v223
    %243 = vmatprep.subr.mxu0 0.0
    %244 = vmatpush1.msra.mxu0 0.0
    %245 = vmatprep.subr.mxu0 0.0
    %246 = vmatpush1.msra.mxu0 0.0
    %247 = vmatprep.subr.mxu0 0.0
    %248 = vmatpush1.msra.mxu0 0.0
    %249 = vmatprep.subr.mxu0 0.0
    %250 = vmatpush1.msra.mxu0 0.0
    %251 = vmatprep.subr.mxu0 0.0
    %252 = vmatpush1.msra.mxu0 0.0
    %253 = vmatprep.subr.mxu0 0.0
    %254 = vmatpush1.msra.mxu0 0.0
    %255 = vmatprep.subr.mxu0 0.0
    %256 = vmatpush1.msra.mxu0 0.0
    %257 = vmatprep.subr.mxu0 0.0
    %258 = vmatpush1.msra.mxu0 0.0
    %259 = vmatprep.subr.mxu0 0.0
    %260 = vmatpush1.msra.mxu0 0.0
    %261 = vmatprep.subr.mxu0 0.0
    %262 = vmatpush1.msra.mxu0 0.0
    %263 = vmatprep.subr.mxu0 0.0
    %264 = vmatpush1.msra.mxu0 0.0
    %265 = vmatprep.subr.mxu0 0.0
    %266 = vmatpush1.msra.mxu0 0.0
    %267 = vmatprep.subr.mxu0 0.0
    %268 = vmatpush1.msra.mxu0 0.0
    %269 = vmatprep.subr.mxu0 0.0
    %270 = vmatpush1.msra.mxu0 0.0
    %271 = vmatprep.subr.mxu0 0.0
    %272 = vmatpush1.msra.mxu0 0.0
    %273 = vmatprep.subr.mxu0 0.0
    %274 = vmatpush1.msra.mxu0 0.0
    %275 = vmatprep.subr.mxu0 0.0
    %276 = vmatpush1.msra.mxu0 0.0
    %277 = vmatprep.subr.mxu0 0.0
    %278 = vmatpush1.msra.mxu0 0.0
    %279 = vmatprep.subr.mxu0 0.0
    %280 = vmatpush1.msra.mxu0 0.0
    %281 = vmatprep.subr.mxu0 0.0
    %282 = vmatpush1.msra.mxu0 0.0
    %283 = vmatprep.subr.mxu0 0.0
    %284 = vmatpush1.msra.mxu0 0.0
    %285 = vmatprep.subr.mxu0 0.0
    %286 = vmatpush1.msra.mxu0 0.0
    %287 = vmatprep.subr.mxu0 0.0
    %288 = vmatpush1.msra.mxu0 0.0
    %289 = vmatprep.subr.mxu0 0.0
    %290 = vmatpush1.msra.mxu0 0.0
    %291 = vmatprep.subr.mxu0 0.0
    %292 = vmatpush1.msra.mxu0 0.0
    %293 = vmatprep.subr.mxu0 0.0
    %294 = vmatpush1.msra.mxu0 0.0
    %295 = vmatprep.subr.mxu0 0.0
    %296 = vmatpush1.msra.mxu0 0.0
    %297 = vmatprep.subr.mxu0 0.0
    %298 = vmatpush1.msra.mxu0 0.0
    %299 = vmatprep.mubr.f32.mxu0 0.0
    %300 = vmatmul.mubr.f32.gmra.mrb[0].mxu0 %v233
    %v301 = vpop.f32.mrb[0].mxu0
    %v302 = vadd.f32 %v230, %v301
    %v303 = vpop.f32.mrb[0].mxu0
    %304 = vdwg.mxu0
    %v305 = vmax.f32 %v302, 0.0
    %v306 = vld [vmem:[%s6] sm:$0xff]
    %v307 = vld [vmem:[%s6 + $0x8] sm:$0xff]
    %v308 = vld [vmem:[%s6 + $0x10] sm:$0xff]
    %v309 = vld [vmem:[%s6 + $0x18] sm:$0xff]
    %s310 = scalar_lea.vmem %s6, 32
    %v311 = vld [vmem:[%s310] sm:$0xff]
    %v312 = vld [vmem:[%s310 + $0x8] sm:$0xff]
    %v313 = vld [vmem:[%s310 + $0x10] sm:$0xff]
    %v314 = vld [vmem:[%s310 + $0x18] sm:$0xff]
    %v316 = vsel %vm55, %v217, 0
    %318 = vmatprep.subr.mxu0 0.0
    %319 = vmatpush1.msra.mxu0 %v311
    %320 = vmatprep.subr.mxu0 0.0
    %321 = vmatpush1.msra.mxu0 %v312
    %322 = vmatprep.subr.mxu0 0.0
    %323 = vmatpush1.msra.mxu0 %v313
    %324 = vmatprep.subr.mxu0 0.0
    %325 = vmatpush1.msra.mxu0 %v314
    %326 = vmatprep.subr.mxu0 0.0
    %327 = vmatpush1.msra.mxu0 0.0
    %328 = vmatprep.subr.mxu0 0.0
    %329 = vmatpush1.msra.mxu0 0.0
    %330 = vmatprep.subr.mxu0 0.0
    %331 = vmatpush1.msra.mxu0 0.0
    %332 = vmatprep.subr.mxu0 0.0
    %333 = vmatpush1.msra.mxu0 0.0
    %334 = vmatprep.subr.mxu0 0.0
    %335 = vmatpush1.msra.mxu0 0.0
    %336 = vmatprep.subr.mxu0 0.0
    %337 = vmatpush1.msra.mxu0 0.0
    %338 = vmatprep.subr.mxu0 0.0
    %339 = vmatpush1.msra.mxu0 0.0
    %340 = vmatprep.subr.mxu0 0.0
    %341 = vmatpush1.msra.mxu0 0.0
    %342 = vmatprep.subr.mxu0 0.0
    %343 = vmatpush1.msra.mxu0 0.0
    %344 = vmatprep.subr.mxu0 0.0
    %345 = vmatpush1.msra.mxu0 0.0
    %346 = vmatprep.subr.mxu0 0.0
    %347 = vmatpush1.msra.mxu0 0.0
    %348 = vmatprep.subr.mxu0 0.0
    %349 = vmatpush1.msra.mxu0 0.0
    %350 = vmatprep.subr.mxu0 0.0
    %351 = vmatpush1.msra.mxu0 0.0
    %352 = vmatprep.subr.mxu0 0.0
    %353 = vmatpush1.msra.mxu0 0.0
    %354 = vmatprep.subr.mxu0 0.0
    %355 = vmatpush1.msra.mxu0 0.0
    %356 = vmatprep.subr.mxu0 0.0
    %357 = vmatpush1.msra.mxu0 0.0
    %358 = vmatprep.subr.mxu0 0.0
    %359 = vmatpush1.msra.mxu0 0.0
    %360 = vmatprep.subr.mxu0 0.0
    %361 = vmatpush1.msra.mxu0 0.0
    %362 = vmatprep.subr.mxu0 0.0
    %363 = vmatpush1.msra.mxu0 0.0
    %364 = vmatprep.subr.mxu0 0.0
    %365 = vmatpush1.msra.mxu0 0.0
    %366 = vmatprep.subr.mxu0 0.0
    %367 = vmatpush1.msra.mxu0 0.0
    %368 = vmatprep.subr.mxu0 0.0
    %369 = vmatpush1.msra.mxu0 0.0
    %370 = vmatprep.subr.mxu0 0.0
    %371 = vmatpush1.msra.mxu0 0.0
    %372 = vmatprep.subr.mxu0 0.0
    %373 = vmatpush1.msra.mxu0 0.0
    %374 = vmatprep.subr.mxu0 0.0
    %375 = vmatpush1.msra.mxu0 0.0
    %376 = vmatprep.subr.mxu0 0.0
    %377 = vmatpush1.msra.mxu0 0.0
    %378 = vmatprep.subr.mxu0 0.0
    %379 = vmatpush1.msra.mxu0 0.0
    %380 = vmatprep.subr.mxu0 0.0
    %381 = vmatpush1.msra.mxu0 0.0
    %382 = vmatprep.mubr.f32.mxu0 0.0
    %383 = vmatmul.mubr.f32.gmra.mrb[0].mxu0 %v316
    %v384 = vpop.f32.mrb[0].mxu0
    %v385 = vadd.f32 0.0, %v384
    %v386 = vpop.f32.mrb[0].mxu0
    %387 = vdwg.mxu0
    %v389 = vsel %vm55, %v129, 0
    %391 = vmatprep.subr.mxu0 0.0
    %392 = vmatpush1.msra.mxu0 %v306
    %393 = vmatprep.subr.mxu0 0.0
    %394 = vmatpush1.msra.mxu0 %v307
    %395 = vmatprep.subr.mxu0 0.0
    %396 = vmatpush1.msra.mxu0 %v308
    %397 = vmatprep.subr.mxu0 0.0
    %398 = vmatpush1.msra.mxu0 %v309
    %399 = vmatprep.subr.mxu0 0.0
    %400 = vmatpush1.msra.mxu0 0.0
    %401 = vmatprep.subr.mxu0 0.0
    %402 = vmatpush1.msra.mxu0 0.0
    %403 = vmatprep.subr.mxu0 0.0
    %404 = vmatpush1.msra.mxu0 0.0
    %405 = vmatprep.subr.mxu0 0.0
    %406 = vmatpush1.msra.mxu0 0.0
    %407 = vmatprep.subr.mxu0 0.0
    %408 = vmatpush1.msra.mxu0 0.0
    %409 = vmatprep.subr.mxu0 0.0
    %410 = vmatpush1.msra.mxu0 0.0
    %411 = vmatprep.subr.mxu0 0.0
    %412 = vmatpush1.msra.mxu0 0.0
    %413 = vmatprep.subr.mxu0 0.0
    %414 = vmatpush1.msra.mxu0 0.0
    %415 = vmatprep.subr.mxu0 0.0
    %416 = vmatpush1.msra.mxu0 0.0
    %417 = vmatprep.subr.mxu0 0.0
    %418 = vmatpush1.msra.mxu0 0.0
    %419 = vmatprep.subr.mxu0 0.0
    %420 = vmatpush1.msra.mxu0 0.0
    %421 = vmatprep.subr.mxu0 0.0
    %422 = vmatpush1.msra.mxu0 0.0
    %423 = vmatprep.subr.mxu0 0.0
    %424 = vmatpush1.msra.mxu0 0.0
    %425 = vmatprep.subr.mxu0 0.0
    %426 = vmatpush1.msra.mxu0 0.0
    %427 = vmatprep.subr.mxu0 0.0
    %428 = vmatpush1.msra.mxu0 0.0
    %429 = vmatprep.subr.mxu0 0.0
    %430 = vmatpush1.msra.mxu0 0.0
    %431 = vmatprep.subr.mxu0 0.0
    %432 = vmatpush1.msra.mxu0 0.0
    %433 = vmatprep.subr.mxu0 0.0
    %434 = vmatpush1.msra.mxu0 0.0
    %435 = vmatprep.subr.mxu0 0.0
    %436 = vmatpush1.msra.mxu0 0.0
    %437 = vmatprep.subr.mxu0 0.0
    %438 = vmatpush1.msra.mxu0 0.0
    %439 = vmatprep.subr.mxu0 0.0
    %440 = vmatpush1.msra.mxu0 0.0
    %441 = vmatprep.subr.mxu0 0.0
    %442 = vmatpush1.msra.mxu0 0.0
    %443 = vmatprep.subr.mxu0 0.0
    %444 = vmatpush1.msra.mxu0 0.0
    %445 = vmatprep.subr.mxu0 0.0
    %446 = vmatpush1.msra.mxu0 0.0
    %447 = vmatprep.subr.mxu0 0.0
    %448 = vmatpush1.msra.mxu0 0.0
    %449 = vmatprep.subr.mxu0 0.0
    %450 = vmatpush1.msra.mxu0 0.0
    %451 = vmatprep.subr.mxu0 0.0
    %452 = vmatpush1.msra.mxu0 0.0
    %453 = vmatprep.subr.mxu0 0.0
    %454 = vmatpush1.msra.mxu0 0.0
    %455 = vmatprep.mubr.f32.mxu0 0.0
    %456 = vmatmul.mubr.f32.gmra.mrb[0].mxu0 %v389
    %v457 = vpop.f32.mrb[0].mxu0
    %v458 = vadd.f32 %v385, %v457
    %v459 = vpop.f32.mrb[0].mxu0
    %460 = vdwg.mxu0
    %s461 = scalar_lea.vmem %s6, 64
    %v462 = vld [vmem:[%s461] sm:$0xff]
    %v463 = vld [vmem:[%s461 + $0x8] sm:$0xff]
    %v464 = vld [vmem:[%s461 + $0x10] sm:$0xff]
    %v465 = vld [vmem:[%s461 + $0x18] sm:$0xff]
    %v467 = vsel %vm55, %v305, 0
    %469 = vmatprep.subr.mxu0 0.0
    %470 = vmatpush1.msra.mxu0 %v462
    %471 = vmatprep.subr.mxu0 0.0
    %472 = vmatpush1.msra.mxu0 %v463
    %473 = vmatprep.subr.mxu0 0.0
    %474 = vmatpush1.msra.mxu0 %v464
    %475 = vmatprep.subr.mxu0 0.0
    %476 = vmatpush1.msra.mxu0 %v465
    %477 = vmatprep.subr.mxu0 0.0
    %478 = vmatpush1.msra.mxu0 0.0
    %479 = vmatprep.subr.mxu0 0.0
    %480 = vmatpush1.msra.mxu0 0.0
    %481 = vmatprep.subr.mxu0 0.0
    %482 = vmatpush1.msra.mxu0 0.0
    %483 = vmatprep.subr.mxu0 0.0
    %484 = vmatpush1.msra.mxu0 0.0
    %485 = vmatprep.subr.mxu0 0.0
    %486 = vmatpush1.msra.mxu0 0.0
    %487 = vmatprep.subr.mxu0 0.0
    %488 = vmatpush1.msra.mxu0 0.0
    %489 = vmatprep.subr.mxu0 0.0
    %490 = vmatpush1.msra.mxu0 0.0
    %491 = vmatprep.subr.mxu0 0.0
    %492 = vmatpush1.msra.mxu0 0.0
    %493 = vmatprep.subr.mxu0 0.0
    %494 = vmatpush1.msra.mxu0 0.0
    %495 = vmatprep.subr.mxu0 0.0
    %496 = vmatpush1.msra.mxu0 0.0
    %497 = vmatprep.subr.mxu0 0.0
    %498 = vmatpush1.msra.mxu0 0.0
    %499 = vmatprep.subr.mxu0 0.0
    %500 = vmatpush1.msra.mxu0 0.0
    %501 = vmatprep.subr.mxu0 0.0
    %502 = vmatpush1.msra.mxu0 0.0
    %503 = vmatprep.subr.mxu0 0.0
    %504 = vmatpush1.msra.mxu0 0.0
    %505 = vmatprep.subr.mxu0 0.0
    %506 = vmatpush1.msra.mxu0 0.0
    %507 = vmatprep.subr.mxu0 0.0
    %508 = vmatpush1.msra.mxu0 0.0
    %509 = vmatprep.subr.mxu0 0.0
    %510 = vmatpush1.msra.mxu0 0.0
    %511 = vmatprep.subr.mxu0 0.0
    %512 = vmatpush1.msra.mxu0 0.0
    %513 = vmatprep.subr.mxu0 0.0
    %514 = vmatpush1.msra.mxu0 0.0
    %515 = vmatprep.subr.mxu0 0.0
    %516 = vmatpush1.msra.mxu0 0.0
    %517 = vmatprep.subr.mxu0 0.0
    %518 = vmatpush1.msra.mxu0 0.0
    %519 = vmatprep.subr.mxu0 0.0
    %520 = vmatpush1.msra.mxu0 0.0
    %521 = vmatprep.subr.mxu0 0.0
    %522 = vmatpush1.msra.mxu0 0.0
    %523 = vmatprep.subr.mxu0 0.0
    %524 = vmatpush1.msra.mxu0 0.0
    %525 = vmatprep.subr.mxu0 0.0
    %526 = vmatpush1.msra.mxu0 0.0
    %527 = vmatprep.subr.mxu0 0.0
    %528 = vmatpush1.msra.mxu0 0.0
    %529 = vmatprep.subr.mxu0 0.0
    %530 = vmatpush1.msra.mxu0 0.0
    %531 = vmatprep.subr.mxu0 0.0
    %532 = vmatpush1.msra.mxu0 0.0
    %533 = vmatprep.mubr.f32.mxu0 0.0
    %534 = vmatmul.mubr.f32.gmra.mrb[0].mxu0 %v467
    %v535 = vpop.f32.mrb[0].mxu0
    %v536 = vadd.f32 0.0, %v535
    %v537 = vpop.f32.mrb[0].mxu0
    %538 = vdwg.mxu0
    %v539 = vadd.f32 %v458, %v536
    %v540 = vld [vmem:[%s7] sm:$0x1]
    %v542 = vlaneseq
    %v543 = vshrl.u32 %v542, 7
    %v544 = vsub.s32 0, %v543
    %v545 = vrot.slane %v540, %v544
    %v547 = vadd.f32 %v539, %v545
    %548 = vxpose.xlu0.b32.start [1/16] %v547, 128
    %549 = vxpose.xlu0.b32.cont [2/16] 0.0, 128
    %550 = vxpose.xlu0.b32.cont [3/16] 0.0, 128
    %551 = vxpose.xlu0.b32.cont [4/16] 0.0, 128
    %552 = vxpose.xlu0.b32.cont [5/16] 0.0, 128
    %553 = vxpose.xlu0.b32.cont [6/16] 0.0, 128
    %554 = vxpose.xlu0.b32.cont [7/16] 0.0, 128
    %555 = vxpose.xlu0.b32.cont [8/16] 0.0, 128
    %556 = vxpose.xlu0.b32.cont [9/16] 0.0, 128
    %557 = vxpose.xlu0.b32.cont [10/16] 0.0, 128
    %558 = vxpose.xlu0.b32.cont [11/16] 0.0, 128
    %559 = vxpose.xlu0.b32.cont [12/16] 0.0, 128
    %560 = vxpose.xlu0.b32.cont [13/16] 0.0, 128
    %561 = vxpose.xlu0.b32.cont [14/16] 0.0, 128
    %562 = vxpose.xlu0.b32.cont [15/16] 0.0, 128
    %563 = vxpose.xlu0.b32.end [16/16] 0.0, 128
    %v564 = vpop.trf.xlu0
    %v565 = vpop.trf.xlu0
    %v566 = vpop.trf.xlu0
    %v567 = vpop.trf.xlu0
    %v568 = vpop.trf.xlu0
    %v569 = vpop.trf.xlu0
    %v570 = vpop.trf.xlu0
    %v571 = vpop.trf.xlu0
    %v572 = vpop.trf.xlu0
    %v573 = vpop.trf.xlu0
    %v574 = vpop.trf.xlu0
    %v575 = vpop.trf.xlu0
    %v576 = vpop.trf.xlu0
    %v577 = vpop.trf.xlu0
    %v578 = vpop.trf.xlu0
    %v579 = vpop.trf.xlu0
    %v580 = vxor.u32 %v564, 2147483648
    %v581 = vmul.f32 %v580, 1.442695
    %v582 = vpow.pop %v581
    %v583 = vadd.f32 %v582, 1.0
    %v584 = vrcp.pop %v583
    %v585 = vmul.f32 1.0, %v584
    %s586 = sld [smem:[#allocation2]]
    %s587 = sld [smem:[#allocation2 + $0x1]]
    %s588 = sld [smem:[#allocation2 + $0x2]]
    %s589 = sld [smem:[#allocation2 + $0x3]]
    %v591 = vrot.slane %v564, 6
    %v593 = vmul.f32 %v564, %v591
    %v595 = vrot.slane %v585, 6
    %v597 = vmul.f32 %v564, %v595
    %v599 = vrot.slane %v597, 1
    %v601 = vadd.f32 %v593, %v599
    %v602 = vstv %s586
    %v603 = vadd.f32 %v601, %v602
    %v604 = vrot.slane %v564, 4
    %v606 = vmul.f32 %v564, %v604
    %v607 = vrot.slane %v585, 4
    %v609 = vmul.f32 %v564, %v607
    %v611 = vrot.slane %v609, 1
    %v613 = vadd.f32 %v606, %v611
    %v615 = vrot.slane %v603, 4
    %v617 = vmul.f32 %v564, %v615
    %v619 = vrot.slane %v617, 2
    %v621 = vadd.f32 %v613, %v619
    %v622 = vstv %s588
    %v623 = vadd.f32 %v621, %v622
    %v624 = vrot.slane %v564, 1
    %v626 = vmul.f32 %v564, %v624
    %v627 = vrot.slane %v585, 1
    %v629 = vmul.f32 %v565, %v627
    %v631 = vrot.slane %v629, 1
    %v633 = vadd.f32 %v626, %v631
    %v634 = vrot.slane %v603, 1
    %v636 = vmul.f32 %v565, %v634
    %v638 = vrot.slane %v636, 2
    %v640 = vadd.f32 %v633, %v638
    %v641 = vstv %s587
    %v642 = vadd.f32 %v640, %v641
    %v643 = vxor.u32 %v642, 2147483648
    %v644 = vmul.f32 %v643, 1.442695
    %v645 = vpow.pop %v644
    %v646 = vadd.f32 %v645, 1.0
    %v647 = vrcp.pop %v646
    %v648 = vmul.f32 1.0, %v647
    %v649 = vmul.f32 %v565, %v591
    %v650 = vmul.f32 %v565, %v595
    %v652 = vrot.slane %v650, 1
    %v654 = vadd.f32 %v649, %v652
    %v655 = vrot.slane %v603, 6
    %v657 = vmul.f32 %v565, %v655
    %v659 = vrot.slane %v657, 2
    %v661 = vadd.f32 %v654, %v659
    %v663 = vrot.slane %v623, 7
    %v665 = vmul.f32 %v565, %v663
    %v667 = vrot.slane %v665, 3
    %v669 = vadd.f32 %v661, %v667
    %v671 = vrot.slane %v648, 1
    %v673 = vmul.f32 %v565, %v671
    %v675 = vrot.slane %v673, 4
    %v677 = vadd.f32 %v669, %v675
    %v678 = vstv %s589
    %v679 = vadd.f32 %v677, %v678
    %v680 = vxor.u32 %v679, 2147483648
    %v681 = vmul.f32 %v680, 1.442695
    %v682 = vpow.pop %v681
    %v683 = vadd.f32 %v682, 1.0
    %v684 = vrcp.pop %v683
    %v685 = vmul.f32 1.0, %v684
    %v686 = vrot.slane %v623, 1
    %v688 = vrot.slane %v648, 3
    %v691 = vrot.slane %v685, 5
    %vm693 = vcmask 1040384
    %v694 = vsel %vm693, %v564, %v585
    %vm695 = vcmask 1041408
    %v696 = vsel %vm695, %v694, %v603
    %vm697 = vcmask 1042432
    %v698 = vsel %vm697, %v696, %v686
    %vm699 = vcmask 1043456
    %v700 = vsel %vm699, %v698, %v688
    %vm701 = vcmask 1044480
    %v702 = vsel %vm701, %v700, %v691
    %vm703 = vcmask 62464
    %704 = vst.msk [vmem:[#allocation5] sm:$0x3f] %vm703, %v702
    // Predicated region
    $region38: #{tpu_custom_call.1} parent=1 // pred_check
      _
    $region39: #{tpu_custom_call.1} parent=1 // pred_check_branch
      %706 = sbr.rel (0) target = $region41
    $region40: #{tpu_custom_call.1} parent=1 // pred_region
      %s708 = ssub.s32 128, 128
      %709 = vsyncadd [#allocation3], %s708
      %s711 = sshll.u32 [#allocation5], 4
      %s712 = int_to_ptr.vmem [resolvable:$true] %s711
      %714 = dma.vmem_to_hbm [thread:$0]  %s712, 128, %s8, [#allocation3]
    $region41: #{tpu_custom_call.1} parent=1 // pred_fallthru
      _
    // Predicated region
    $region42: #{tpu_custom_call.1} parent=1 // pred_check
      _
    $region43: #{tpu_custom_call.1} parent=1 // pred_check_branch
      %716 = sbr.rel (0) target = $region45
    $region44: #{tpu_custom_call.1} parent=1 // pred_region
      %717 = dma.done [#allocation3], 128
    $region45: #{tpu_custom_call.1} parent=1 // pred_fallthru
      _
    %718 = vsyncpa [#allocation3], 1
    %719 = vsyncpa [#allocation4], 1

</llo_original>
